<compile_context>
chip_gen: v7x
topology: tpu7x:2x2x1
jax: 0.10.0
libtpu: 0.0.40
codegen_flags: <defaults>
</compile_context>

<pallas_src>
import math
import functools

import jax
import jax.numpy as jnp
from jax.experimental import pallas as pl
from jax.experimental.pallas import tpu as pltpu


# ---------------------------------------------------------------------------
# Parameter / buffer setup (glue, plain JAX) — mirrors nn.Module.__init__
# ---------------------------------------------------------------------------
def make_positional_encoding(d_model: int, max_len: int = 5000,
                             dtype=jnp.float32) -> jnp.ndarray:
    """Builds the `pe` buffer with shape (max_len, 1, d_model)."""
    position = jnp.arange(max_len, dtype=jnp.float32)[:, None]            # (L, 1)
    div_term = jnp.exp(
        jnp.arange(0, d_model, 2, dtype=jnp.float32)
        * (-math.log(10000.0) / d_model))                                 # (D/2,)
    pe = jnp.zeros((max_len, 1, d_model), dtype=jnp.float32)
    pe = pe.at[:, 0, 0::2].set(jnp.sin(position * div_term))
    pe = pe.at[:, 0, 1::2].set(jnp.cos(position * div_term))
    return pe.astype(dtype)


# ---------------------------------------------------------------------------
# Tile selection: ~2 MiB x/out blocks (fits double-buffered inside the default
# scoped-VMEM budget of every TPU generation, incl. v7x's smaller VMEM).
# ---------------------------------------------------------------------------
def _choose_tiles(B: int, S: int, D: int, itemsize: int,
                  target_bytes: int = 2 * 1024 * 1024):
    row_bytes = max(1, D * itemsize)
    rows = max(1, target_bytes // row_bytes)      # rows of D that fit the budget
    if rows >= S:
        # Whole sequence fits in one block: batch several batch elements per
        # step so small problems aren't dominated by per-step overhead.
        ts = S
        tb = int(max(1, min(B, rows // S)))
    else:
        # Tile the sequence axis; keep the sublane dim a multiple of 8.
        ts = int(max(8, (rows // 8) * 8))
        ts = min(ts, S)
        tb = 1
    return tb, ts


# ---------------------------------------------------------------------------
# Pallas kernel: elementwise add of the PE table + (optional) inverted dropout
# ---------------------------------------------------------------------------
def _pe_add_dropout_kernel(seed_ref, x_ref, pe_ref, o_ref, *, p_drop, training):
    # x_ref:  (TB, TS, D)  one (batch-tile, seq-tile) block per grid step
    # pe_ref: (TS, D)      positional table tile (broadcast over batch)
    x = x_ref[...]
    pe = pe_ref[...]
    y = x + pe[None, :, :]

    if training and p_drop > 0.0:
        tb, ts, d = x_ref.shape
        tile_elems = tb * ts * d
        # Unique-per-element id across the whole grid (unique per tile via the
        # grid-step base, unique within the tile via local strides).
        tile_id = pl.program_id(0) * pl.num_programs(1) + pl.program_id(1)
        base = tile_id * tile_elems                                   # int32 (wraps ok)
        loc = (jax.lax.broadcasted_iota(jnp.int32, y.shape, 0) * (ts * d)
               + jax.lax.broadcasted_iota(jnp.int32, y.shape, 1) * d
               + jax.lax.broadcasted_iota(jnp.int32, y.shape, 2))
        idx = (loc + base).astype(jnp.uint32)

        # Stateless hash (murmur3 finalizer) of (seed, element id) -> uint32 bits.
        seed_u = seed_ref[0].astype(jnp.uint32)
        h = idx ^ (seed_u * jnp.uint32(0x9E3779B9))
        h = h ^ (h >> 16)
        h = h * jnp.uint32(0x85EBCA6B)
        h = h ^ (h >> 13)
        h = h * jnp.uint32(0xC2B2AE35)
        h = h ^ (h >> 16)

        # Inverted dropout: keep with prob (1 - p), scale kept values.
        keep_threshold = min(int(round((1.0 - p_drop) * 4294967296.0)),
                             4294967295)
        keep = h < jnp.uint32(keep_threshold)
        y = jnp.where(keep, y * (1.0 / (1.0 - p_drop)), jnp.zeros_like(y))

    o_ref[...] = y.astype(o_ref.dtype)


# ---------------------------------------------------------------------------
# Python wrapper (the "forward")
# ---------------------------------------------------------------------------
def positional_encoding_forward(x: jnp.ndarray,
                                pe: jnp.ndarray,
                                *,
                                p_drop: float = 0.1,
                                training: bool = False,
                                seed: int = 0) -> jnp.ndarray:
    """x: (B, S, D) batch-first.  pe: (max_len, 1, D).  Returns (B, S, D)."""
    B, S, D = x.shape
    pe_sd = pe[:S, 0, :]                                   # (S, D)
    seed_arr = jnp.array([seed], dtype=jnp.int32)

    itemsize = x.dtype.itemsize
    TB, TS = _choose_tiles(B, S, D, itemsize)
    # Seq-tile axis OUTER, batch axis INNER: the pe block index is constant
    # across inner steps, so Pallas does not re-DMA it (HBM traffic ~2N + S*D
    # instead of 3N).
    grid = (pl.cdiv(S, TS), pl.cdiv(B, TB))

    kernel = functools.partial(_pe_add_dropout_kernel,
                               p_drop=p_drop, training=training)

    cost = pl.CostEstimate(
        flops=B * S * D,
        transcendentals=0,
        bytes_accessed=(2 * B * S * D + S * D) * itemsize)

    return pl.pallas_call(
        kernel,
        out_shape=jax.ShapeDtypeStruct((B, S, D), x.dtype),
        grid_spec=pltpu.PrefetchScalarGridSpec(
            num_scalar_prefetch=1,            # seed -> SMEM
            grid=grid,
            in_specs=[
                pl.BlockSpec((TB, TS, D), lambda s, b, seed: (b, s, 0)),
                pl.BlockSpec((TS, D),     lambda s, b, seed: (s, 0)),
            ],
            out_specs=pl.BlockSpec((TB, TS, D), lambda s, b, seed: (b, s, 0)),
        ),
        compiler_params=pltpu.CompilerParams(
            dimension_semantics=("parallel", "parallel")),
        cost_estimate=cost,
    )(seed_arr, x, pe_sd)


# ---------------------------------------------------------------------------
# Demo / self-check
# ---------------------------------------------------------------------------
if __name__ == "__main__":
    B, S, D = 2, 8, 32          # batch, seq, d_model
    MAX_LEN = 64                # small max_len for the synthetic buffer
    P_DROP = 0.1

    key = jax.random.PRNGKey(0)
    x = jax.random.normal(key, (B, S, D), dtype=jnp.float32)

    pe = make_positional_encoding(D, max_len=MAX_LEN)

    # Eval-mode forward (dropout is identity), deterministic and checkable.
    out = positional_encoding_forward(x, pe, p_drop=P_DROP, training=False)
    out = jax.block_until_ready(out)

    # Pure-JAX reference of the PyTorch forward in eval mode:
    #   transpose -> add pe[:S] -> (identity dropout) -> transpose back
    ref = (jnp.transpose(x, (1, 0, 2)) + pe[:S]).transpose(1, 0, 2)
    assert out.shape == (B, S, D)
    assert jnp.allclose(out, ref, atol=1e-6), "mismatch vs reference"

    # Training-mode path (stochastic dropout mask from the in-kernel hash).
    out_train = positional_encoding_forward(x, pe, p_drop=P_DROP,
                                            training=True, seed=123)
    out_train = jax.block_until_ready(out_train)
    assert out_train.shape == (B, S, D)
    assert bool(jnp.all(jnp.isfinite(out_train)))
    # Every element must be either dropped (0) or the scaled eval value.
    scale = 1.0 / (1.0 - P_DROP)
    is_zero = out_train == 0.0
    is_scaled = jnp.isclose(out_train, ref * scale, atol=1e-5)
    assert bool(jnp.all(is_zero | is_scaled)), "dropout values inconsistent"
    zero_frac = float(jnp.mean(is_zero.astype(jnp.float32)))
    assert 0.0 < zero_frac < 0.6, f"implausible dropout fraction {zero_frac}"

    print("KERNEL_OK")
</pallas_src>

<mosaic_0001>
module attributes {stable_mosaic.version = 11 : i64} {
  func.func @_pe_add_dropout_kernel(%arg0: i32, %arg1: i32, %arg2: memref<1xi32, #tpu.memory_space<smem>>, %arg3: memref<2x8x32xf32, #tpu.memory_space<vmem>>, %arg4: memref<8x32xf32, #tpu.memory_space<vmem>>, %arg5: memref<2x8x32xf32, #tpu.memory_space<vmem>>) attributes {dimension_semantics = [#tpu.dimension_semantics<parallel>, #tpu.dimension_semantics<parallel>], iteration_bounds = array<i64: 1, 1>, scalar_prefetch = 1 : i64, scratch_operands = 0 : i64, tpu.core_type = #tpu.core_type<tc>, window_params = [{transform_indices = @transform_0, window_bounds = array<i64: 2, 8, 32>}, {transform_indices = @transform_1, window_bounds = array<i64: 8, 32>}, {transform_indices = @transform_2, window_bounds = array<i64: 2, 8, 32>}]} {
    %c0 = arith.constant 0 : index
    %c0_0 = arith.constant 0 : index
    %c0_1 = arith.constant 0 : index
    %0 = vector.load %arg3[%c0, %c0_0, %c0_1] : memref<2x8x32xf32, #tpu.memory_space<vmem>>, vector<2x8x32xf32>
    %c0_2 = arith.constant 0 : index
    %c0_3 = arith.constant 0 : index
    %1 = vector.load %arg4[%c0_2, %c0_3] : memref<8x32xf32, #tpu.memory_space<vmem>>, vector<8x32xf32>
    %2 = vector.shape_cast %1 : vector<8x32xf32> to vector<1x8x32xf32>
    %3 = vector.broadcast %2 : vector<1x8x32xf32> to vector<2x8x32xf32>
    %4 = arith.addf %0, %3 : vector<2x8x32xf32>
    %c0_4 = arith.constant 0 : index
    %c0_5 = arith.constant 0 : index
    %c0_6 = arith.constant 0 : index
    %5 = vector.load %arg5[%c0_4, %c0_5, %c0_6] : memref<2x8x32xf32, #tpu.memory_space<vmem>>, vector<2x8x32xf32>
    tpu.vector_store %arg5[%c0_4, %c0_5, %c0_6], %4 {strides = array<i32>} : memref<2x8x32xf32, #tpu.memory_space<vmem>>, vector<2x8x32xf32>,
    return
  }
  func.func @transform_0(%arg0: i32, %arg1: i32, %arg2: memref<1xi32, #tpu.memory_space<smem>>) -> (i32, i32, i32) {
    %c0_i32 = arith.constant 0 : i32
    %c0_i32_0 = arith.constant 0 : i32
    return %arg1, %arg0, %c0_i32 : i32, i32, i32
  }
  func.func @transform_1(%arg0: i32, %arg1: i32, %arg2: memref<1xi32, #tpu.memory_space<smem>>) -> (i32, i32) {
    %c0_i32 = arith.constant 0 : i32
    %c0_i32_0 = arith.constant 0 : i32
    return %arg0, %c0_i32 : i32, i32
  }
  func.func @transform_2(%arg0: i32, %arg1: i32, %arg2: memref<1xi32, #tpu.memory_space<smem>>) -> (i32, i32, i32) {
    %c0_i32 = arith.constant 0 : i32
    %c0_i32_0 = arith.constant 0 : i32
    return %arg1, %arg0, %c0_i32 : i32, i32, i32
  }
}

</mosaic_0001>

<llo_original>
// kernel: tpu_custom_call.1
$region0: #{tpu_custom_call.1}
  #allocation0 [shape = 'u32[]', space=smem, size = 0x4, offset = 0x4, fixed_abs, tag = 'smem constant byte address 0x4 - core index']
  #allocation1 [shape = 'u32[144,128]{1,0:T(1,128)}', space=vmem, size = 0x12000, scoped, tag = 'internal scratch']
  #allocation2 [shape = 's32[1]{0}', space=sflag, size = 0x4, scoped, tag = 'scoped memory for tpu_custom_call.1']
  #allocation3 [shape = 's32[1]{0:T(128)S(6)}', space=smem, size = 0x200, scoped, tag = 'prefetched SMEM operand 0']
  %s0 = inlined_call_operand.<no memory space> [shape: s32[1], index: 0, kind: input, shape index: {}]
  %s1 = inlined_call_operand.hbm [shape: f32[2,8,32], index: 1, kind: input, shape index: {}]
  %s2 = inlined_call_operand.hbm [shape: f32[8,32], index: 2, kind: input, shape index: {}]
  %s3 = inlined_call_operand.hbm [shape: f32[2,8,32], index: 3, kind: output, shape index: {}]
  %s4 = sld [smem:[#allocation0]]
  $region26: #{tpu_custom_call.1} parent=0
    _
  %s6 = ssub.s32 1, %s4
  %s7 = scalar_select 0, %s6, %s4
  %8 = sst [smem:[#allocation3]] %s0
  $region1: #{tpu_custom_call.1} parent=0
    #allocation4 [shape = 'u8[8192]{0}', space=vmem, size = 0x2000, scoped, tag = 'input window, operand 1, single buffered']
    #allocation5 [shape = 's32[1]{0}', space=sflag, size = 0x4, scoped, tag = 'scoped memory for tpu_custom_call.1']
    #allocation6 [shape = 's32[1]{0}', space=sflag, size = 0x4, scoped, tag = 'scoped memory for tpu_custom_call.1']
    #allocation7 [shape = 'u8[4096]{0}', space=vmem, size = 0x1000, scoped, tag = 'input window, operand 2, single buffered']
    #allocation8 [shape = 's32[1]{0}', space=sflag, size = 0x4, scoped, tag = 'scoped memory for tpu_custom_call.1']
    #allocation9 [shape = 'u8[8192]{0}', space=vmem, size = 0x2000, scoped, tag = 'output window, operand 0, single buffered']
    %9 = vsyncpa [#allocation5], 0
    %10 = vsyncpa [#allocation8], 0
    %11 = vsyncpa [#allocation6], 0
    // Predicated region
    $region2: #{tpu_custom_call.1} parent=1 // pred_check
      _
    $region3: #{tpu_custom_call.1} parent=1 // pred_check_branch
      %13 = sbr.rel (0) target = $region5
    $region4: #{tpu_custom_call.1} parent=1 // pred_region
      %s15 = ssub.s32 256, 256
      %16 = vsyncadd [#allocation5], %s15
      %s17 = sshll.u32 [#allocation4], 4
      %s18 = int_to_ptr.vmem [resolvable:$true] %s17
      %23 = dma.hbm_to_vmem [thread:$0]  %s1, 256, %s18, [#allocation5], 128, 128, 8
    $region5: #{tpu_custom_call.1} parent=1 // pred_fallthru
      _
    // Predicated region
    $region6: #{tpu_custom_call.1} parent=1 // pred_check
      _
    $region7: #{tpu_custom_call.1} parent=1 // pred_check_branch
      %25 = sbr.rel (0) target = $region9
    $region8: #{tpu_custom_call.1} parent=1 // pred_region
      %s27 = ssub.s32 128, 128
      %28 = vsyncadd [#allocation8], %s27
      %s30 = sshll.u32 [#allocation7], 4
      %s31 = int_to_ptr.vmem [resolvable:$true] %s30
      %33 = dma.hbm_to_vmem [thread:$0]  %s2, 128, %s31, [#allocation8]
    $region9: #{tpu_custom_call.1} parent=1 // pred_fallthru
      _
    // Predicated region
    $region10: #{tpu_custom_call.1} parent=1 // pred_check
      _
    $region11: #{tpu_custom_call.1} parent=1 // pred_check_branch
      %35 = sbr.rel (0) target = $region13
    $region12: #{tpu_custom_call.1} parent=1 // pred_region
      %36 = dma.done [#allocation5], 256
    $region13: #{tpu_custom_call.1} parent=1 // pred_fallthru
      _
    // Predicated region
    $region14: #{tpu_custom_call.1} parent=1 // pred_check
      _
    $region15: #{tpu_custom_call.1} parent=1 // pred_check_branch
      %38 = sbr.rel (0) target = $region17
    $region16: #{tpu_custom_call.1} parent=1 // pred_region
      %39 = dma.done [#allocation8], 128
    $region17: #{tpu_custom_call.1} parent=1 // pred_fallthru
      _
    %v40 = vld [vmem:[#allocation4] sm:$0xff]
    %v41 = vld [vmem:[#allocation4 + $0x8] sm:$0xff]
    %v42 = vld [vmem:[#allocation7] sm:$0xff]
    %v43 = vadd.f32 %v40, %v42
    %v44 = vadd.f32 %v41, %v42
    %vm45 = vcmask 261120
    %46 = vst.msk [vmem:[#allocation9] sm:$0xff] %vm45, %v43
    %47 = vst.msk [vmem:[#allocation9 + $0x8] sm:$0xff] %vm45, %v44
    // Predicated region
    $region18: #{tpu_custom_call.1} parent=1 // pred_check
      _
    $region19: #{tpu_custom_call.1} parent=1 // pred_check_branch
      %49 = sbr.rel (0) target = $region21
    $region20: #{tpu_custom_call.1} parent=1 // pred_region
      %s51 = ssub.s32 256, 256
      %52 = vsyncadd [#allocation6], %s51
      %s53 = sshll.u32 [#allocation9], 4
      %s54 = int_to_ptr.vmem [resolvable:$true] %s53
      %59 = dma.vmem_to_hbm [thread:$0]  %s54, 256, %s3, [#allocation6], 128, 128, 8
    $region21: #{tpu_custom_call.1} parent=1 // pred_fallthru
      _
    // Predicated region
    $region22: #{tpu_custom_call.1} parent=1 // pred_check
      _
    $region23: #{tpu_custom_call.1} parent=1 // pred_check_branch
      %61 = sbr.rel (0) target = $region25
    $region24: #{tpu_custom_call.1} parent=1 // pred_region
      %62 = dma.done [#allocation6], 256
    $region25: #{tpu_custom_call.1} parent=1 // pred_fallthru
      _
    %63 = vsyncpa [#allocation5], 1
    %64 = vsyncpa [#allocation8], 1
    %65 = vsyncpa [#allocation6], 1

</llo_original>
